<compile_context>
chip_gen: v7x
topology: tpu7x:2x2x1
jax: 0.10.0
libtpu: 0.0.40
codegen_flags: <defaults>
</compile_context>

<pallas_src>
import numpy as np
import jax
import jax.numpy as jnp
from jax.experimental import pallas as pl
from jax.experimental.pallas import tpu as pltpu


# ----------------------------- graph definition -----------------------------
edges = [(0, 2), (1, 3), (0, 4), (4, 5), (5, 7), (6, 8)]
nodes = {
    'researcher_1': 0, 'researcher_2': 1, 'area_biology': 2, 'area_chemistry': 3,
    'question_1': 4, 'competence_1': 5, 'competence_2': 6, 'product_1': 7,
    'product_2': 8,
}
NUM_NODES = len(nodes)          # 9
IN_CHANNELS = 16
OUT_CHANNELS = 16
LANE = 128                      # TPU lane width; output-channel dim padded to this
SUBLANE = 8                     # f32 sublane tile; node dim padded to a multiple

HIGHEST = jax.lax.Precision.HIGHEST   # wrapper-side folds / reference in full f32


def build_gcn_norm_adj(num_nodes, edge_list):
    """Dense Ahat = D^{-1/2} (A + I) D^{-1/2}, matching PyG GCNConv defaults
    (directed edges source->target, self-loops added, symmetric normalization)."""
    A = np.zeros((num_nodes, num_nodes), dtype=np.float32)
    for s, t in edge_list:
        A[t, s] = 1.0                         # message from source s aggregated at target t
    A += np.eye(num_nodes, dtype=np.float32)  # self loops
    deg = A.sum(axis=1)
    dinv = 1.0 / np.sqrt(np.maximum(deg, 1e-12))
    return (dinv[:, None] * A) * dinv[None, :]


# ------------------------------- Pallas kernel -------------------------------
def _gcn_mix_kernel(adj_ref, x_ref, w_ref, b_ref, o_ref):
    """out = Ahat_blockdiag @ (X @ W') + b'.

    W'/b' already have softmax(CA) folded in and are zero-padded to 128 lanes,
    so the store is lane-dense and the padded output columns are exactly zero.
    """
    xw = jnp.dot(x_ref[...], w_ref[...], preferred_element_type=jnp.float32)
    o_ref[...] = (jnp.dot(adj_ref[...], xw, preferred_element_type=jnp.float32)
                  + b_ref[...]).astype(o_ref.dtype)


# ------------------------------- wrapper helpers ------------------------------
def _round_up(v, m):
    return -(-v // m) * m


def _fold_params(w, b, causal_attention):
    """Hoist batch-invariant math out of the kernel.

    cw = softmax(CA, axis=1); fold it into the GCN weight/bias and pad the
    output-channel dim to a lane-dense 128 with zero columns (so padded output
    channels are exactly zero and can simply be sliced away)."""
    cin, cout = w.shape
    cpad = max(LANE, _round_up(cout, LANE))
    cw = jax.nn.softmax(causal_attention, axis=1)                       # (cout, cout)
    w_f = jnp.dot(w, cw, precision=HIGHEST)                             # (cin, cout)
    b_f = jnp.dot(b.reshape(1, cout), cw, precision=HIGHEST)            # (1, cout)
    w_p = jnp.zeros((cin, cpad), jnp.float32).at[:, :cout].set(w_f)
    b_p = jnp.zeros((1, cpad), jnp.float32).at[:, :cout].set(b_f)
    return w_p, b_p, cpad


def _pad_adj(adj, n_pad):
    n = adj.shape[0]
    return jnp.zeros((n_pad, n_pad), jnp.float32).at[:n, :n].set(adj)


def _cost(num_blocks, rows, cin, cpad):
    """Advisory cost for the fused kernel: two matmuls per block, no transcendentals
    (the softmax now lives in the wrapper)."""
    per_block_flops = 2 * rows * cin * cpad + 2 * rows * rows * cpad
    bytes_accessed = 4 * (rows * rows + cin * cpad + cpad
                          + num_blocks * rows * (cin + cpad))
    return pl.CostEstimate(flops=num_blocks * per_block_flops,
                           transcendentals=0,
                           bytes_accessed=bytes_accessed)


def _call_nogrid(adj_bd, x2d, w_p, b_p):
    """Single-block call: no grid scaffolding, everything pinned whole in VMEM."""
    rows, cin = x2d.shape
    cpad = w_p.shape[1]
    return pl.pallas_call(
        _gcn_mix_kernel,
        out_shape=jax.ShapeDtypeStruct((rows, cpad), jnp.float32),
        in_specs=[pl.BlockSpec(memory_space=pltpu.MemorySpace.VMEM)] * 4,
        out_specs=pl.BlockSpec(memory_space=pltpu.MemorySpace.VMEM),
        cost_estimate=_cost(1, rows, cin, cpad),
    )(adj_bd, x2d, w_p, b_p)


def _default_num_blocks(batch):
    """2 parallel blocks on v7x (2 TensorCores / chip), else a single block."""
    try:
        kind = jax.devices()[0].device_kind.lower()
    except Exception:
        kind = ""
    two_core = ("v7" in kind) or ("7x" in kind)
    return 2 if (two_core and batch % 2 == 0) else 1


# --------------------------------- public API ---------------------------------
def causal_graph_layer(adj, x, w, b, causal_attention):
    """Single-graph forward (matches CausalGraphLayer.forward).

    Node dim is padded 9->16 (sublane-aligned), output channels to 128 lanes;
    padding is sliced away afterwards."""
    n, cin = x.shape
    cout = w.shape[1]
    n_pad = _round_up(n, SUBLANE)
    w_p, b_p, cpad = _fold_params(w, b, causal_attention)
    adj_p = _pad_adj(adj, n_pad)
    x_p = jnp.zeros((n_pad, cin), jnp.float32).at[:n, :].set(x)
    out = _call_nogrid(adj_p, x_p, w_p, b_p)
    return out[:n, :cout]


def causal_graph_layer_batched(adj, xs, w, b, causal_attention, num_blocks=None):
    """Batched forward over xs: (B, N, Cin).

    The batch is folded into `num_blocks` large blocks: each block stacks
    B/num_blocks padded graphs into a (rows, Cin) slab and aggregates with a
    shared block-diagonal Ahat, so the grid is 1 step on v5e/v6e and 2
    "parallel" steps on v7x instead of B tiny steps."""
    bsz, n, cin = xs.shape
    cout = w.shape[1]
    if num_blocks is None:
        num_blocks = _default_num_blocks(bsz)
    if bsz % num_blocks != 0:
        num_blocks = 1
    graphs_per_block = bsz // num_blocks
    n_pad = _round_up(n, SUBLANE)
    rows = graphs_per_block * n_pad

    w_p, b_p, cpad = _fold_params(w, b, causal_attention)
    adj_p = _pad_adj(adj, n_pad)
    # Per-block block-diagonal Ahat; identical for every block, so it is shared
    # across grid steps (index_map always returns block (0, 0)).
    adj_bd = jnp.kron(jnp.eye(graphs_per_block, dtype=jnp.float32), adj_p)

    xs_p = jnp.zeros((bsz, n_pad, cin), jnp.float32).at[:, :n, :].set(xs)
    x_blocks = xs_p.reshape(num_blocks, rows, cin)

    if num_blocks == 1:
        out2d = _call_nogrid(adj_bd, x_blocks[0], w_p, b_p)
        out = out2d.reshape(bsz, n_pad, cpad)
    else:
        out = pl.pallas_call(
            _gcn_mix_kernel,
            out_shape=jax.ShapeDtypeStruct((num_blocks, rows, cpad), jnp.float32),
            grid=(num_blocks,),
            in_specs=[
                pl.BlockSpec((rows, rows), lambda g: (0, 0)),           # shared block-diag Ahat
                pl.BlockSpec((None, rows, cin), lambda g: (g, 0, 0)),   # this block's graphs
                pl.BlockSpec((cin, cpad), lambda g: (0, 0)),            # folded W'
                pl.BlockSpec((1, cpad), lambda g: (0, 0)),              # folded b'
            ],
            out_specs=pl.BlockSpec((None, rows, cpad), lambda g: (g, 0, 0)),
            compiler_params=pltpu.CompilerParams(
                dimension_semantics=("parallel",)),                     # v7x: 2 TCs split blocks
            cost_estimate=_cost(num_blocks, rows, cin, cpad),
        )(adj_bd, x_blocks, w_p, b_p)
        out = out.reshape(bsz, n_pad, cpad)
    return out[:, :n, :cout]


# ------------------------------ reference (JAX) ------------------------------
def reference(adj, x, w, b, ca):
    x_conv = jnp.dot(adj, jnp.dot(x, w, precision=HIGHEST), precision=HIGHEST) + b
    cw = jax.nn.softmax(ca, axis=1)
    return jnp.dot(x_conv, cw, precision=HIGHEST)


if __name__ == "__main__":
    key = jax.random.PRNGKey(0)
    k_x, k_w, k_b, k_ca, k_xb = jax.random.split(key, 5)

    # Deterministic synthetic inputs / parameters.
    x = jax.random.uniform(k_x, (NUM_NODES, IN_CHANNELS), dtype=jnp.float32)        # torch.rand
    w = jax.random.normal(k_w, (IN_CHANNELS, OUT_CHANNELS), dtype=jnp.float32) * 0.1
    b = jax.random.normal(k_b, (OUT_CHANNELS,), dtype=jnp.float32) * 0.1
    causal_attention = jax.random.normal(k_ca, (OUT_CHANNELS, OUT_CHANNELS),         # torch.randn
                                         dtype=jnp.float32)

    adj = jnp.asarray(build_gcn_norm_adj(NUM_NODES, edges))

    # --- single graph (matches the PyTorch module forward) ---
    out = jax.block_until_ready(causal_graph_layer(adj, x, w, b, causal_attention))
    ref = reference(adj, x, w, b, causal_attention)
    np.testing.assert_allclose(np.asarray(out), np.asarray(ref), rtol=1e-5, atol=1e-5)

    # --- batched: fold B graphs into large sublane-aligned blocks ---
    B = 8
    xs = jax.random.uniform(k_xb, (B, NUM_NODES, IN_CHANNELS), dtype=jnp.float32)
    ref_b = jax.vmap(lambda xi: reference(adj, xi, w, b, causal_attention))(xs)

    # Single block (v5e/v6e: one TensorCore -> one 128-row fused slab, no grid loop).
    out_b1 = jax.block_until_ready(
        causal_graph_layer_batched(adj, xs, w, b, causal_attention, num_blocks=1))
    np.testing.assert_allclose(np.asarray(out_b1), np.asarray(ref_b), rtol=1e-5, atol=1e-5)

    # Two parallel blocks (v7x: shards across the 2 TensorCores; harmless elsewhere).
    out_b2 = jax.block_until_ready(
        causal_graph_layer_batched(adj, xs, w, b, causal_attention, num_blocks=2))
    np.testing.assert_allclose(np.asarray(out_b2), np.asarray(ref_b), rtol=1e-5, atol=1e-5)

    # Auto-detected default (2 blocks on v7x, 1 otherwise).
    out_bd = jax.block_until_ready(
        causal_graph_layer_batched(adj, xs, w, b, causal_attention))
    np.testing.assert_allclose(np.asarray(out_bd), np.asarray(ref_b), rtol=1e-5, atol=1e-5)

    print("KERNEL_OK")
</pallas_src>

<mosaic_0001>
module attributes {stable_mosaic.version = 11 : i64} {
  func.func @_gcn_mix_kernel(%arg0: memref<16x16xf32, #tpu.memory_space<vmem>>, %arg1: memref<16x16xf32, #tpu.memory_space<vmem>>, %arg2: memref<16x128xf32, #tpu.memory_space<vmem>>, %arg3: memref<1x128xf32, #tpu.memory_space<vmem>>, %arg4: memref<16x128xf32, #tpu.memory_space<vmem>>) attributes {dimension_semantics = [], scalar_prefetch = 0 : i64, scratch_operands = 0 : i64, tpu.core_type = #tpu.core_type<tc>} {
    %c0 = arith.constant 0 : index
    %c0_0 = arith.constant 0 : index
    %0 = vector.load %arg1[%c0, %c0_0] : memref<16x16xf32, #tpu.memory_space<vmem>>, vector<16x16xf32>
    %c0_1 = arith.constant 0 : index
    %c0_2 = arith.constant 0 : index
    %1 = vector.load %arg2[%c0_1, %c0_2] : memref<16x128xf32, #tpu.memory_space<vmem>>, vector<16x128xf32>
    %cst = arith.constant dense<0.000000e+00> : vector<16x128xf32>
    %2 = tpu.matmul %0, %1, %cst {dimension_numbers = #tpu.dot_dimension_numbers<[1], [0], [0], [1], [0, 0, 1, 1], [], []>} : vector<16x16xf32>, vector<16x128xf32>, vector<16x128xf32> -> vector<16x128xf32>
    %c0_3 = arith.constant 0 : index
    %c0_4 = arith.constant 0 : index
    %3 = vector.load %arg0[%c0_3, %c0_4] : memref<16x16xf32, #tpu.memory_space<vmem>>, vector<16x16xf32>
    %cst_5 = arith.constant dense<0.000000e+00> : vector<16x128xf32>
    %4 = tpu.matmul %3, %2, %cst_5 {dimension_numbers = #tpu.dot_dimension_numbers<[1], [0], [0], [1], [0, 0, 1, 1], [], []>} : vector<16x16xf32>, vector<16x128xf32>, vector<16x128xf32> -> vector<16x128xf32>
    %c0_6 = arith.constant 0 : index
    %c0_7 = arith.constant 0 : index
    %5 = vector.load %arg3[%c0_6, %c0_7] : memref<1x128xf32, #tpu.memory_space<vmem>>, vector<1x128xf32>
    %6 = vector.broadcast %5 : vector<1x128xf32> to vector<16x128xf32>
    %7 = arith.addf %4, %6 : vector<16x128xf32>
    %c0_8 = arith.constant 0 : index
    %c0_9 = arith.constant 0 : index
    %8 = vector.load %arg4[%c0_8, %c0_9] : memref<16x128xf32, #tpu.memory_space<vmem>>, vector<16x128xf32>
    tpu.vector_store %arg4[%c0_8, %c0_9], %7 {strides = array<i32>} : memref<16x128xf32, #tpu.memory_space<vmem>>, vector<16x128xf32>,
    return
  }
}

</mosaic_0001>

<llo_original>
// kernel: tpu_custom_call.1
$region0: #{tpu_custom_call.1}
  #allocation0 [shape = 'u32[]', space=smem, size = 0x4, offset = 0x4, fixed_abs, tag = 'smem constant byte address 0x4 - core index']
  #allocation1 [shape = 'u32[144,128]{1,0:T(1,128)}', space=vmem, size = 0x12000, scoped, tag = 'internal scratch']
  %s0 = inlined_call_operand.hbm [shape: f32[16,16], index: 0, kind: input, shape index: {}]
  %s1 = inlined_call_operand.hbm [shape: f32[16,16], index: 1, kind: input, shape index: {}]
  %s2 = inlined_call_operand.hbm [shape: f32[16,128], index: 2, kind: input, shape index: {}]
  %s3 = inlined_call_operand.vmem [shape: f32[1,128], index: 3, kind: input, shape index: {}]
  %s4 = inlined_call_operand.hbm [shape: f32[16,128], index: 4, kind: output, shape index: {}]
  %s5 = sld [smem:[#allocation0]]
  $region38: #{tpu_custom_call.1} parent=0
    _
  %s7 = ssub.s32 1, %s5
  %s8 = scalar_select 0, %s7, %s5
  $region1: #{tpu_custom_call.1} parent=0
    #allocation2 [shape = 'u8[8192]{0}', space=vmem, size = 0x2000, scoped, tag = 'input window, operand 0, single buffered']
    #allocation3 [shape = 's32[1]{0}', space=sflag, size = 0x4, scoped, tag = 'scoped memory for tpu_custom_call.1']
    #allocation4 [shape = 's32[1]{0}', space=sflag, size = 0x4, scoped, tag = 'scoped memory for tpu_custom_call.1']
    #allocation5 [shape = 'u8[8192]{0}', space=vmem, size = 0x2000, scoped, tag = 'input window, operand 1, single buffered']
    #allocation6 [shape = 's32[1]{0}', space=sflag, size = 0x4, scoped, tag = 'scoped memory for tpu_custom_call.1']
    #allocation7 [shape = 'u8[8192]{0}', space=vmem, size = 0x2000, scoped, tag = 'input window, operand 2, single buffered']
    #allocation8 [shape = 'u8[8192]{0}', space=vmem, size = 0x2000, scoped, tag = 'output window, operand 0, single buffered']
    %9 = vsyncpa [#allocation3], 0
    %10 = vsyncpa [#allocation6], 0
    %11 = vsyncpa [#allocation4], 0
    // Predicated region
    $region2: #{tpu_custom_call.1} parent=1 // pred_check
      _
    $region3: #{tpu_custom_call.1} parent=1 // pred_check_branch
      %13 = sbr.rel (0) target = $region5
    $region4: #{tpu_custom_call.1} parent=1 // pred_region
      %s15 = ssub.s32 256, 256
      %16 = vsyncadd [#allocation3], %s15
      %s17 = sshll.u32 [#allocation2], 4
      %s18 = int_to_ptr.vmem [resolvable:$true] %s17
      %23 = dma.hbm_to_vmem [thread:$0]  %s0, 256, %s18, [#allocation3], 128, 128, 8
    $region5: #{tpu_custom_call.1} parent=1 // pred_fallthru
      _
    // Predicated region
    $region6: #{tpu_custom_call.1} parent=1 // pred_check
      _
    $region7: #{tpu_custom_call.1} parent=1 // pred_check_branch
      %25 = sbr.rel (0) target = $region9
    $region8: #{tpu_custom_call.1} parent=1 // pred_region
      %s27 = ssub.s32 256, 256
      %28 = vsyncadd [#allocation6], %s27
      %s29 = sshll.u32 [#allocation5], 4
      %s30 = int_to_ptr.vmem [resolvable:$true] %s29
      %35 = dma.hbm_to_vmem [thread:$0]  %s1, 256, %s30, [#allocation6], 128, 128, 8
    $region9: #{tpu_custom_call.1} parent=1 // pred_fallthru
      _
    // Predicated region
    $region10: #{tpu_custom_call.1} parent=1 // pred_check
      _
    $region11: #{tpu_custom_call.1} parent=1 // pred_check_branch
      %37 = sbr.rel (0) target = $region13
    $region12: #{tpu_custom_call.1} parent=1 // pred_region
      %s39 = ssub.s32 256, 256
      %40 = vsyncadd [#allocation6], %s39
      %s41 = sshll.u32 [#allocation7], 4
      %s42 = int_to_ptr.vmem [resolvable:$true] %s41
      %47 = dma.hbm_to_vmem [thread:$0]  %s2, 256, %s42, [#allocation6], 128, 128, 8
    $region13: #{tpu_custom_call.1} parent=1 // pred_fallthru
      _
    // Predicated region
    $region14: #{tpu_custom_call.1} parent=1 // pred_check
      _
    $region15: #{tpu_custom_call.1} parent=1 // pred_check_branch
      %49 = sbr.rel (0) target = $region17
    $region16: #{tpu_custom_call.1} parent=1 // pred_region
      _
    $region17: #{tpu_custom_call.1} parent=1 // pred_fallthru
      _
    // Predicated region
    $region18: #{tpu_custom_call.1} parent=1 // pred_check
      _
    $region19: #{tpu_custom_call.1} parent=1 // pred_check_branch
      %51 = sbr.rel (0) target = $region21
    $region20: #{tpu_custom_call.1} parent=1 // pred_region
      %52 = dma.done [#allocation3], 256
    $region21: #{tpu_custom_call.1} parent=1 // pred_fallthru
      _
    // Predicated region
    $region22: #{tpu_custom_call.1} parent=1 // pred_check
      _
    $region23: #{tpu_custom_call.1} parent=1 // pred_check_branch
      %54 = sbr.rel (0) target = $region25
    $region24: #{tpu_custom_call.1} parent=1 // pred_region
      %55 = dma.done [#allocation6], 256
    $region25: #{tpu_custom_call.1} parent=1 // pred_fallthru
      _
    // Predicated region
    $region26: #{tpu_custom_call.1} parent=1 // pred_check
      _
    $region27: #{tpu_custom_call.1} parent=1 // pred_check_branch
      %57 = sbr.rel (0) target = $region29
    $region28: #{tpu_custom_call.1} parent=1 // pred_region
      %58 = dma.done [#allocation6], 256
    $region29: #{tpu_custom_call.1} parent=1 // pred_fallthru
      _
    %v59 = vld [vmem:[#allocation5] sm:$0xff]
    %v60 = vld [vmem:[#allocation5 + $0x8] sm:$0xff]
    %v61 = vld [vmem:[#allocation7] sm:$0xff]
    %v62 = vld [vmem:[#allocation7 + $0x8] sm:$0xff]
    %vm63 = vcmask 130048
    %v65 = vsel %vm63, %v59, 0
    %v68 = vsel %vm63, %v60, 0
    %70 = vmatprep.subr.mxu0 0.0
    %71 = vmatpush1.msra.mxu0 %v61
    %72 = vmatprep.subr.mxu0 0.0
    %73 = vmatpush1.msra.mxu0 %v62
    %74 = vmatprep.subr.mxu0 0.0
    %75 = vmatpush1.msra.mxu0 0.0
    %76 = vmatprep.subr.mxu0 0.0
    %77 = vmatpush1.msra.mxu0 0.0
    %78 = vmatprep.subr.mxu0 0.0
    %79 = vmatpush1.msra.mxu0 0.0
    %80 = vmatprep.subr.mxu0 0.0
    %81 = vmatpush1.msra.mxu0 0.0
    %82 = vmatprep.subr.mxu0 0.0
    %83 = vmatpush1.msra.mxu0 0.0
    %84 = vmatprep.subr.mxu0 0.0
    %85 = vmatpush1.msra.mxu0 0.0
    %86 = vmatprep.subr.mxu0 0.0
    %87 = vmatpush1.msra.mxu0 0.0
    %88 = vmatprep.subr.mxu0 0.0
    %89 = vmatpush1.msra.mxu0 0.0
    %90 = vmatprep.subr.mxu0 0.0
    %91 = vmatpush1.msra.mxu0 0.0
    %92 = vmatprep.subr.mxu0 0.0
    %93 = vmatpush1.msra.mxu0 0.0
    %94 = vmatprep.subr.mxu0 0.0
    %95 = vmatpush1.msra.mxu0 0.0
    %96 = vmatprep.subr.mxu0 0.0
    %97 = vmatpush1.msra.mxu0 0.0
    %98 = vmatprep.subr.mxu0 0.0
    %99 = vmatpush1.msra.mxu0 0.0
    %100 = vmatprep.subr.mxu0 0.0
    %101 = vmatpush1.msra.mxu0 0.0
    %102 = vmatprep.subr.mxu0 0.0
    %103 = vmatpush1.msra.mxu0 0.0
    %104 = vmatprep.subr.mxu0 0.0
    %105 = vmatpush1.msra.mxu0 0.0
    %106 = vmatprep.subr.mxu0 0.0
    %107 = vmatpush1.msra.mxu0 0.0
    %108 = vmatprep.subr.mxu0 0.0
    %109 = vmatpush1.msra.mxu0 0.0
    %110 = vmatprep.subr.mxu0 0.0
    %111 = vmatpush1.msra.mxu0 0.0
    %112 = vmatprep.subr.mxu0 0.0
    %113 = vmatpush1.msra.mxu0 0.0
    %114 = vmatprep.subr.mxu0 0.0
    %115 = vmatpush1.msra.mxu0 0.0
    %116 = vmatprep.subr.mxu0 0.0
    %117 = vmatpush1.msra.mxu0 0.0
    %118 = vmatprep.subr.mxu0 0.0
    %119 = vmatpush1.msra.mxu0 0.0
    %120 = vmatprep.subr.mxu0 0.0
    %121 = vmatpush1.msra.mxu0 0.0
    %122 = vmatprep.subr.mxu0 0.0
    %123 = vmatpush1.msra.mxu0 0.0
    %124 = vmatprep.subr.mxu0 0.0
    %125 = vmatpush1.msra.mxu0 0.0
    %126 = vmatprep.subr.mxu0 0.0
    %127 = vmatpush1.msra.mxu0 0.0
    %128 = vmatprep.subr.mxu0 0.0
    %129 = vmatpush1.msra.mxu0 0.0
    %130 = vmatprep.subr.mxu0 0.0
    %131 = vmatpush1.msra.mxu0 0.0
    %132 = vmatprep.subr.mxu0 0.0
    %133 = vmatpush1.msra.mxu0 0.0
    %134 = vmatprep.mubr.f32.mxu0 0.0
    %135 = vmatmul.mubr.f32.gmra.mrb[0].mxu0 %v65
    %v136 = vpop.f32.mrb[0].mxu0
    %v137 = vadd.f32 0.0, %v136
    %v138 = vpop.f32.mrb[0].mxu0
    %139 = vmatprep.mubr.f32.mxu0 0.0
    %140 = vmatmul.mubr.f32.gmra.mrb[0].mxu0 %v68
    %v141 = vpop.f32.mrb[0].mxu0
    %v142 = vadd.f32 0.0, %v141
    %v143 = vpop.f32.mrb[0].mxu0
    %144 = vdwg.mxu0
    %v145 = vld [vmem:[#allocation2] sm:$0xff]
    %v146 = vld [vmem:[#allocation2 + $0x8] sm:$0xff]
    %v147 = vld [vmem:[%s3] sm:$0x1]
    %v149 = vlaneseq
    %v150 = vshrl.u32 %v149, 7
    %v151 = vsub.s32 0, %v150
    %v152 = vrot.slane %v147, %v151
    %v155 = vsel %vm63, %v145, 0
    %v158 = vsel %vm63, %v146, 0
    %160 = vmatprep.subr.mxu0 0.0
    %161 = vmatpush1.msra.mxu0 %v137
    %162 = vmatprep.subr.mxu0 0.0
    %163 = vmatpush1.msra.mxu0 %v142
    %164 = vmatprep.subr.mxu0 0.0
    %165 = vmatpush1.msra.mxu0 0.0
    %166 = vmatprep.subr.mxu0 0.0
    %167 = vmatpush1.msra.mxu0 0.0
    %168 = vmatprep.subr.mxu0 0.0
    %169 = vmatpush1.msra.mxu0 0.0
    %170 = vmatprep.subr.mxu0 0.0
    %171 = vmatpush1.msra.mxu0 0.0
    %172 = vmatprep.subr.mxu0 0.0
    %173 = vmatpush1.msra.mxu0 0.0
    %174 = vmatprep.subr.mxu0 0.0
    %175 = vmatpush1.msra.mxu0 0.0
    %176 = vmatprep.subr.mxu0 0.0
    %177 = vmatpush1.msra.mxu0 0.0
    %178 = vmatprep.subr.mxu0 0.0
    %179 = vmatpush1.msra.mxu0 0.0
    %180 = vmatprep.subr.mxu0 0.0
    %181 = vmatpush1.msra.mxu0 0.0
    %182 = vmatprep.subr.mxu0 0.0
    %183 = vmatpush1.msra.mxu0 0.0
    %184 = vmatprep.subr.mxu0 0.0
    %185 = vmatpush1.msra.mxu0 0.0
    %186 = vmatprep.subr.mxu0 0.0
    %187 = vmatpush1.msra.mxu0 0.0
    %188 = vmatprep.subr.mxu0 0.0
    %189 = vmatpush1.msra.mxu0 0.0
    %190 = vmatprep.subr.mxu0 0.0
    %191 = vmatpush1.msra.mxu0 0.0
    %192 = vmatprep.subr.mxu0 0.0
    %193 = vmatpush1.msra.mxu0 0.0
    %194 = vmatprep.subr.mxu0 0.0
    %195 = vmatpush1.msra.mxu0 0.0
    %196 = vmatprep.subr.mxu0 0.0
    %197 = vmatpush1.msra.mxu0 0.0
    %198 = vmatprep.subr.mxu0 0.0
    %199 = vmatpush1.msra.mxu0 0.0
    %200 = vmatprep.subr.mxu0 0.0
    %201 = vmatpush1.msra.mxu0 0.0
    %202 = vmatprep.subr.mxu0 0.0
    %203 = vmatpush1.msra.mxu0 0.0
    %204 = vmatprep.subr.mxu0 0.0
    %205 = vmatpush1.msra.mxu0 0.0
    %206 = vmatprep.subr.mxu0 0.0
    %207 = vmatpush1.msra.mxu0 0.0
    %208 = vmatprep.subr.mxu0 0.0
    %209 = vmatpush1.msra.mxu0 0.0
    %210 = vmatprep.subr.mxu0 0.0
    %211 = vmatpush1.msra.mxu0 0.0
    %212 = vmatprep.subr.mxu0 0.0
    %213 = vmatpush1.msra.mxu0 0.0
    %214 = vmatprep.subr.mxu0 0.0
    %215 = vmatpush1.msra.mxu0 0.0
    %216 = vmatprep.subr.mxu0 0.0
    %217 = vmatpush1.msra.mxu0 0.0
    %218 = vmatprep.subr.mxu0 0.0
    %219 = vmatpush1.msra.mxu0 0.0
    %220 = vmatprep.subr.mxu0 0.0
    %221 = vmatpush1.msra.mxu0 0.0
    %222 = vmatprep.subr.mxu0 0.0
    %223 = vmatpush1.msra.mxu0 0.0
    %224 = vmatprep.mubr.f32.mxu0 0.0
    %225 = vmatmul.mubr.f32.gmra.mrb[0].mxu0 %v155
    %v226 = vpop.f32.mrb[0].mxu0
    %v227 = vadd.f32 %v152, %v226
    %v228 = vpop.f32.mrb[0].mxu0
    %229 = vmatprep.mubr.f32.mxu0 0.0
    %230 = vmatmul.mubr.f32.gmra.mrb[0].mxu0 %v158
    %v231 = vpop.f32.mrb[0].mxu0
    %v232 = vadd.f32 %v152, %v231
    %v233 = vpop.f32.mrb[0].mxu0
    %234 = vdwg.mxu0
    %235 = vst [vmem:[#allocation8] sm:$0xff] %v227
    %236 = vst [vmem:[#allocation8 + $0x8] sm:$0xff] %v232
    // Predicated region
    $region30: #{tpu_custom_call.1} parent=1 // pred_check
      _
    $region31: #{tpu_custom_call.1} parent=1 // pred_check_branch
      %238 = sbr.rel (0) target = $region33
    $region32: #{tpu_custom_call.1} parent=1 // pred_region
      %s240 = ssub.s32 256, 256
      %241 = vsyncadd [#allocation4], %s240
      %s242 = sshll.u32 [#allocation8], 4
      %s243 = int_to_ptr.vmem [resolvable:$true] %s242
      %248 = dma.vmem_to_hbm [thread:$0]  %s243, 256, %s4, [#allocation4], 128, 128, 8
    $region33: #{tpu_custom_call.1} parent=1 // pred_fallthru
      _
    // Predicated region
    $region34: #{tpu_custom_call.1} parent=1 // pred_check
      _
    $region35: #{tpu_custom_call.1} parent=1 // pred_check_branch
      %250 = sbr.rel (0) target = $region37
    $region36: #{tpu_custom_call.1} parent=1 // pred_region
      %251 = dma.done [#allocation4], 256
    $region37: #{tpu_custom_call.1} parent=1 // pred_fallthru
      _
    %252 = vsyncpa [#allocation3], 1
    %253 = vsyncpa [#allocation6], 1
    %254 = vsyncpa [#allocation4], 1

</llo_original>
